<compile_context>
chip_gen: v6e
topology: v6e:2x2x1
jax: 0.10.0
libtpu: 0.0.40
codegen_flags: <defaults>
</compile_context>

<pallas_src>
import functools
import math

import jax
import jax.numpy as jnp
from jax import lax
from jax.experimental import pallas as pl
from jax.experimental.pallas import tpu as pltpu

_BN_EPS = 1e-5
_TM, _TN, _TK_CAP = 256, 512, 2048


def _round_up(x, m):
    return (x + m - 1) // m * m


def _ceil_div(a, b):
    return -(-a // b)


# ----------------------------------------------------------------------------
# Pallas kernel: tiled matmul (bf16 inputs, f32 accumulator) with fused
# per-column bias add, optional residual add and optional ReLU in finalize.
# ----------------------------------------------------------------------------
def _matmul_kernel(*refs, apply_relu, has_residual):
    if has_residual:
        a_ref, b_ref, c_ref, r_ref, o_ref, acc_ref = refs
    else:
        a_ref, b_ref, c_ref, o_ref, acc_ref = refs
        r_ref = None

    @pl.when(pl.program_id(2) == 0)
    def _init():
        acc_ref[...] = jnp.zeros_like(acc_ref)

    acc_ref[...] += jnp.dot(a_ref[...], b_ref[...],
                            preferred_element_type=jnp.float32)

    @pl.when(pl.program_id(2) == pl.num_programs(2) - 1)
    def _fin():
        y = acc_ref[...] + c_ref[...]          # (tm,tn) + (1,tn) broadcast
        if has_residual:
            y = y + r_ref[...]
        if apply_relu:
            y = jnp.maximum(y, 0.0)
        o_ref[...] = y.astype(o_ref.dtype)


def _pick_tk(kp):
    """Largest 128-multiple <= _TK_CAP that exactly divides kp (kp % 128 == 0)."""
    if kp <= _TK_CAP:
        return kp
    units = kp // 128
    best = 1
    for d in range(1, units + 1):
        if units % d == 0 and d * 128 <= _TK_CAP:
            best = d
    return best * 128


def _fused_matmul(a, b, bias, relu, residual=None):
    """relu_opt(a @ b + bias [+ residual]); bias is per output column."""
    M, K = a.shape
    Kb, N = b.shape
    assert K == Kb

    # --- K padding / tiling: pad only when K is not already tile-friendly.
    if K % 128 == 0 or (K < 128 and K % 8 == 0):
        Kp = K
    else:
        Kp = _round_up(K, 128)
    tk = _pick_tk(Kp) if Kp % 128 == 0 else Kp

    Mp = _round_up(M, 8)
    Np = _round_up(N, 128)
    tm = min(_TM, Mp)
    tn = min(_TN, Np)
    gm = _ceil_div(Mp, tm)
    gn = _ceil_div(Np, tn)
    gk = Kp // tk

    a = a.astype(jnp.bfloat16)
    if (Mp, Kp) != (M, K):
        a = jnp.pad(a, ((0, Mp - M), (0, Kp - K)))
    b = b.astype(jnp.bfloat16)
    if (Kp, Np) != (K, N):
        b = jnp.pad(b, ((0, Kp - K), (0, Np - N)))
    c = bias.reshape(1, N).astype(jnp.float32)
    if Np != N:
        c = jnp.pad(c, ((0, 0), (0, Np - N)))

    in_specs = [
        pl.BlockSpec((tm, tk), lambda i, j, k: (i, k)),
        pl.BlockSpec((tk, tn), lambda i, j, k: (k, j)),
        pl.BlockSpec((1, tn), lambda i, j, k: (0, j)),
    ]
    args = [a, b, c]
    has_res = residual is not None
    if has_res:
        r = residual.astype(jnp.float32)
        if (Mp, Np) != (M, N):
            r = jnp.pad(r, ((0, Mp - M), (0, Np - N)))
        in_specs.append(pl.BlockSpec((tm, tn), lambda i, j, k: (i, j)))
        args.append(r)

    out = pl.pallas_call(
        functools.partial(_matmul_kernel, apply_relu=relu,
                          has_residual=has_res),
        out_shape=jax.ShapeDtypeStruct((gm * tm, gn * tn), jnp.float32),
        grid_spec=pltpu.PrefetchScalarGridSpec(
            num_scalar_prefetch=0,
            grid=(gm, gn, gk),
            in_specs=in_specs,
            out_specs=pl.BlockSpec((tm, tn), lambda i, j, k: (i, j)),
            scratch_shapes=[pltpu.VMEM((tm, tn), jnp.float32)],
        ),
        compiler_params=pltpu.CompilerParams(
            dimension_semantics=("parallel", "parallel", "arbitrary")),
    )(*args)
    return out[:M, :N]


# ----------------------------------------------------------------------------
# Conv2d (NHWC internal layout) = light patch gather + fused Pallas matmul.
# ----------------------------------------------------------------------------
@functools.partial(jax.jit,
                   static_argnames=("stride", "padding", "dilation", "relu"))
def conv2d(x, w, bias, residual=None, *, stride=1, padding=0, dilation=1,
           relu=False):
    """x: (N,H,W,C) f32.  w: (Cout,Cin,kh,kw).  Returns (N,Ho,Wo,Cout)."""
    N, H, W, C = x.shape
    Cout, Cin, kh, kw = w.shape
    Ho = (H + 2 * padding - dilation * (kh - 1) - 1) // stride + 1
    Wo = (W + 2 * padding - dilation * (kw - 1) - 1) // stride + 1

    xb = x.astype(jnp.bfloat16)
    if kh == 1 and kw == 1 and padding == 0:
        # 1x1 conv: no im2col at all.
        xs = xb[:, ::stride, ::stride, :] if stride > 1 else xb
        a = xs.reshape(N * Ho * Wo, C)
    else:
        xp = jnp.pad(xb, ((0, 0), (padding, padding), (padding, padding), (0, 0)))
        cols = []
        for i in range(kh):
            for j in range(kw):
                cols.append(lax.slice(
                    xp,
                    (0, i * dilation, j * dilation, 0),
                    (N, i * dilation + (Ho - 1) * stride + 1,
                     j * dilation + (Wo - 1) * stride + 1, C),
                    (1, stride, stride, 1)))
        a = jnp.concatenate(cols, axis=3).reshape(N * Ho * Wo, kh * kw * C)

    # K order is (kh, kw, Cin) -> match with weight reorder.
    bmat = w.transpose(2, 3, 1, 0).reshape(kh * kw * Cin, Cout)
    res2d = None
    if residual is not None:
        res2d = residual.reshape(N * Ho * Wo, Cout)
    out = _fused_matmul(a, bmat, bias, relu, residual=res2d)
    return out.reshape(N, Ho, Wo, Cout)


def conv_bn(x, p, *, stride=1, padding=0, dilation=1, relu=True,
            residual=None):
    """Conv + folded eval-mode BatchNorm (+ optional residual add + ReLU)."""
    bn = p["bn"]
    inv = bn["gamma"] * lax.rsqrt(bn["var"] + _BN_EPS)
    w = p["w"] * inv[:, None, None, None]          # fold scale into weights
    b = bn["beta"] - bn["mean"] * inv
    return conv2d(x, w, b, residual, stride=stride, padding=padding,
                  dilation=dilation, relu=relu)


# ----------------------------------------------------------------------------
# Parameter init (deterministic, synthetic).
# ----------------------------------------------------------------------------
class _Rng:
    def __init__(self, seed=0):
        self.key = jax.random.PRNGKey(seed)

    def next(self):
        self.key, sub = jax.random.split(self.key)
        return sub


def _init_conv(rng, cin, cout, k, bias=False):
    fan_in = cin * k * k
    p = {"w": jax.random.normal(rng.next(), (cout, cin, k, k), jnp.float32)
              * (1.0 / math.sqrt(fan_in))}
    if bias:
        p["b"] = 0.01 * jax.random.normal(rng.next(), (cout,), jnp.float32)
    return p


def _init_bn(cout):
    return {"gamma": jnp.ones((cout,), jnp.float32),
            "beta": jnp.zeros((cout,), jnp.float32),
            "mean": jnp.zeros((cout,), jnp.float32),
            "var": jnp.ones((cout,), jnp.float32)}


def _init_convbn(rng, cin, cout, k):
    return {"w": _init_conv(rng, cin, cout, k)["w"], "bn": _init_bn(cout)}


# ----------------------------------------------------------------------------
# ResNet encoder (torchvision-style, replace_stride_with_dilation=[F, F, T]).
# ----------------------------------------------------------------------------
def _init_bottleneck(rng, inplanes, planes, stride, dilation, has_down):
    p = {"conv1": _init_convbn(rng, inplanes, planes, 1),
         "conv2": _init_convbn(rng, planes, planes, 3),
         "conv3": _init_convbn(rng, planes, planes * 4, 1),
         "stride": stride, "dilation": dilation}
    if has_down:
        p["down"] = _init_convbn(rng, inplanes, planes * 4, 1)
    return p


def _init_layer(rng, state, planes, blocks, stride, dilate):
    previous_dilation = state["dilation"]
    if dilate:
        state["dilation"] *= stride
        stride = 1
    inplanes = state["inplanes"]
    has_down = (stride != 1 or inplanes != planes * 4)
    layers = [_init_bottleneck(rng, inplanes, planes, stride,
                               previous_dilation, has_down)]
    inplanes = planes * 4
    for _ in range(1, blocks):
        layers.append(_init_bottleneck(rng, inplanes, planes, 1,
                                       state["dilation"], False))
    state["inplanes"] = inplanes
    return layers


def init_resnet_encoder(rng, in_channels, variant="resnet50"):
    cfg = {"resnet50": [3, 4, 6, 3], "resnet101": [3, 4, 23, 3]}[variant]
    p = {"stem": _init_convbn(rng, in_channels, 64, 7)}
    state = {"inplanes": 64, "dilation": 1}
    p["layer1"] = _init_layer(rng, state, 64, cfg[0], stride=1, dilate=False)
    p["layer2"] = _init_layer(rng, state, 128, cfg[1], stride=2, dilate=False)
    p["layer3"] = _init_layer(rng, state, 256, cfg[2], stride=2, dilate=False)
    p["layer4"] = _init_layer(rng, state, 512, cfg[3], stride=2, dilate=True)
    return p


def _bottleneck_fwd(x, p):
    identity = x
    out = conv_bn(x, p["conv1"], relu=True)
    out = conv_bn(out, p["conv2"], stride=p["stride"], padding=p["dilation"],
                  dilation=p["dilation"], relu=True)
    if "down" in p:
        identity = conv_bn(x, p["down"], stride=p["stride"], relu=False)
    # conv3 + BN + residual add + ReLU fused in one Pallas call.
    return conv_bn(out, p["conv3"], relu=True, residual=identity)


def _maxpool_3x3_s2_p1(x):
    # NHWC maxpool.
    return lax.reduce_window(x, -jnp.inf, lax.max,
                             window_dimensions=(1, 3, 3, 1),
                             window_strides=(1, 2, 2, 1),
                             padding=((0, 0), (1, 1), (1, 1), (0, 0)))


def resnet_encoder_fwd(x, p):
    x0 = x                                                 # 1/1
    x = conv_bn(x, p["stem"], stride=2, padding=3, relu=True)
    x1 = x                                                 # 1/2, 64ch
    x = _maxpool_3x3_s2_p1(x)
    for blk in p["layer1"]:
        x = _bottleneck_fwd(x, blk)
    x2 = x                                                 # 1/4, 256ch
    for blk in p["layer2"]:
        x = _bottleneck_fwd(x, blk)
    x3 = x                                                 # 1/8, 512ch
    for blk in p["layer3"]:
        x = _bottleneck_fwd(x, blk)
    for blk in p["layer4"]:
        x = _bottleneck_fwd(x, blk)
    x4 = x                                                 # 1/16, 2048ch
    return x4, x3, x2, x1, x0


# ----------------------------------------------------------------------------
# ASPP
# ----------------------------------------------------------------------------
def init_aspp(rng, in_channels, atrous_rates):
    oc = 256
    p = {"rates": tuple(atrous_rates),
         "b0": _init_convbn(rng, in_channels, oc, 1)}
    for i, _ in enumerate(atrous_rates):
        p["b%d" % (i + 1)] = _init_convbn(rng, in_channels, oc, 3)
    p["pool"] = _init_convbn(rng, in_channels, oc, 1)
    p["project"] = _init_convbn(rng, (2 + len(atrous_rates)) * oc, oc, 1)
    return p


def _resize_bilinear(x, hw):
    # F.interpolate(..., mode='bilinear', align_corners=False), NHWC.
    return jax.image.resize(x, (x.shape[0], hw[0], hw[1], x.shape[3]),
                            method="bilinear")


def aspp_fwd(x, p):
    H, W = x.shape[1], x.shape[2]
    res = [conv_bn(x, p["b0"], relu=True)]
    for i, r in enumerate(p["rates"]):
        res.append(conv_bn(x, p["b%d" % (i + 1)], padding=r, dilation=r,
                           relu=True))
    pooled = jnp.mean(x, axis=(1, 2), keepdims=True)       # AdaptiveAvgPool2d(1)
    pooled = conv_bn(pooled, p["pool"], relu=True)
    res.append(_resize_bilinear(pooled, (H, W)))
    y = jnp.concatenate(res, axis=3)
    y = conv_bn(y, p["project"], relu=True)
    # Dropout(0.1) is identity in eval mode.
    return y


# ----------------------------------------------------------------------------
# Decoder
# ----------------------------------------------------------------------------
def init_decoder(rng, channels, feature_channels):
    return {
        "conv1": _init_convbn(rng, feature_channels[0] + channels[0], channels[1], 3),
        "conv2": _init_convbn(rng, feature_channels[1] + channels[1], channels[2], 3),
        "conv3": _init_convbn(rng, feature_channels[2] + channels[2], channels[3], 3),
        "conv4": _init_conv(rng, feature_channels[3] + channels[3], channels[4], 3,
                            bias=True),
    }


def decoder_fwd(x, x3, x2, x1, x0, p):
    x = _resize_bilinear(x, x3.shape[1:3])
    x = jnp.concatenate([x, x3], axis=3)
    x = conv_bn(x, p["conv1"], padding=1, relu=True)
    x = _resize_bilinear(x, x2.shape[1:3])
    x = jnp.concatenate([x, x2], axis=3)
    x = conv_bn(x, p["conv2"], padding=1, relu=True)
    x = _resize_bilinear(x, x1.shape[1:3])
    x = jnp.concatenate([x, x1], axis=3)
    x = conv_bn(x, p["conv3"], padding=1, relu=True)
    x = _resize_bilinear(x, x0.shape[1:3])
    x = jnp.concatenate([x, x0], axis=3)
    x = conv2d(x, p["conv4"]["w"], p["conv4"]["b"], padding=1, relu=False)
    return x


# ----------------------------------------------------------------------------
# Base
# ----------------------------------------------------------------------------
def init_base(seed, backbone, in_channels, out_channels):
    assert backbone in ("resnet50", "resnet101")
    rng = _Rng(seed)
    return {
        "backbone": init_resnet_encoder(rng, in_channels, backbone),
        "aspp": init_aspp(rng, 2048, [3, 6, 9]),
        "decoder": init_decoder(rng, [256, 128, 64, 48, out_channels],
                                [512, 256, 64, in_channels]),
    }


def base_forward(params, x):
    """x: NCHW f32 (PyTorch layout).  Returns NCHW f32."""
    x = x.transpose(0, 2, 3, 1)                            # -> NHWC internal
    x4, x3, x2, x1, x0 = resnet_encoder_fwd(x, params["backbone"])
    y = aspp_fwd(x4, params["aspp"])
    y = decoder_fwd(y, x3, x2, x1, x0, params["decoder"])
    return y.transpose(0, 3, 1, 2)                         # -> NCHW


if __name__ == "__main__":
    in_channels, out_channels = 3, 4
    x = jax.random.normal(jax.random.PRNGKey(0), (2, in_channels, 32, 32),
                          jnp.float32)
    params = init_base(0, "resnet50", in_channels, out_channels)
    y = base_forward(params, x)
    y = jax.block_until_ready(y)
    assert y.shape == (2, out_channels, 32, 32), y.shape
    assert bool(jnp.all(jnp.isfinite(y)))
    print("KERNEL_OK")
</pallas_src>

<mosaic_0001>
module attributes {stable_mosaic.version = 11 : i64} {
  func.func @_matmul_kernel(%arg0: i32, %arg1: i32, %arg2: i32, %arg3: memref<256x256xbf16, #tpu.memory_space<vmem>>, %arg4: memref<256x128xbf16, #tpu.memory_space<vmem>>, %arg5: memref<1x128xf32, #tpu.memory_space<vmem>>, %arg6: memref<256x128xf32, #tpu.memory_space<vmem>>, %arg7: memref<256x128xf32, #tpu.memory_space<vmem>>) attributes {dimension_semantics = [#tpu.dimension_semantics<parallel>, #tpu.dimension_semantics<parallel>, #tpu.dimension_semantics<arbitrary>], iteration_bounds = array<i64: 2, 1, 1>, scalar_prefetch = 0 : i64, scratch_operands = 1 : i64, tpu.core_type = #tpu.core_type<tc>, window_params = [{transform_indices = @transform_0, window_bounds = array<i64: 256, 256>}, {transform_indices = @transform_1, window_bounds = array<i64: 256, 128>}, {transform_indices = @transform_2, window_bounds = array<i64: 1, 128>}, {transform_indices = @transform_3, window_bounds = array<i64: 256, 128>}]} {
    %c0_i32 = arith.constant 0 : i32
    %0 = arith.cmpi eq, %arg2, %c0_i32 : i32
    %1 = arith.extui %0 : i1 to i32
    %c0_i32_0 = arith.constant 0 : i32
    %2 = arith.cmpi ne, %1, %c0_i32_0 : i32
    scf.if %2 {
      %cst_10 = arith.constant 0.000000e+00 : f32
      %12 = vector.broadcast %cst_10 : f32 to vector<256x128xf32>
      %c0_11 = arith.constant 0 : index
      %c0_12 = arith.constant 0 : index
      %13 = vector.load %arg7[%c0_11, %c0_12] : memref<256x128xf32, #tpu.memory_space<vmem>>, vector<256x128xf32>
      tpu.vector_store %arg7[%c0_11, %c0_12], %12 {strides = array<i32>} : memref<256x128xf32, #tpu.memory_space<vmem>>, vector<256x128xf32>,
    } else {
    }
    %c0 = arith.constant 0 : index
    %c0_1 = arith.constant 0 : index
    %3 = vector.load %arg7[%c0, %c0_1] : memref<256x128xf32, #tpu.memory_space<vmem>>, vector<256x128xf32>
    %c0_2 = arith.constant 0 : index
    %c0_3 = arith.constant 0 : index
    %4 = vector.load %arg3[%c0_2, %c0_3] : memref<256x256xbf16, #tpu.memory_space<vmem>>, vector<256x256xbf16>
    %c0_4 = arith.constant 0 : index
    %c0_5 = arith.constant 0 : index
    %5 = vector.load %arg4[%c0_4, %c0_5] : memref<256x128xbf16, #tpu.memory_space<vmem>>, vector<256x128xbf16>
    %cst = arith.constant dense<0.000000e+00> : vector<256x128xf32>
    %6 = tpu.matmul %4, %5, %cst {dimension_numbers = #tpu.dot_dimension_numbers<[1], [0], [0], [1], [0, 0, 1, 1], [], []>} : vector<256x256xbf16>, vector<256x128xbf16>, vector<256x128xf32> -> vector<256x128xf32>
    %7 = arith.addf %3, %6 : vector<256x128xf32>
    %c0_6 = arith.constant 0 : index
    %c0_7 = arith.constant 0 : index
    %8 = vector.load %arg7[%c0_6, %c0_7] : memref<256x128xf32, #tpu.memory_space<vmem>>, vector<256x128xf32>
    tpu.vector_store %arg7[%c0_6, %c0_7], %7 {strides = array<i32>} : memref<256x128xf32, #tpu.memory_space<vmem>>, vector<256x128xf32>,
    %c0_i32_8 = arith.constant 0 : i32
    %9 = arith.cmpi eq, %arg2, %c0_i32_8 : i32
    %10 = arith.extui %9 : i1 to i32
    %c0_i32_9 = arith.constant 0 : i32
    %11 = arith.cmpi ne, %10, %c0_i32_9 : i32
    scf.if %11 {
      %c0_10 = arith.constant 0 : index
      %c0_11 = arith.constant 0 : index
      %12 = vector.load %arg7[%c0_10, %c0_11] : memref<256x128xf32, #tpu.memory_space<vmem>>, vector<256x128xf32>
      %c0_12 = arith.constant 0 : index
      %c0_13 = arith.constant 0 : index
      %13 = vector.load %arg5[%c0_12, %c0_13] : memref<1x128xf32, #tpu.memory_space<vmem>>, vector<1x128xf32>
      %14 = vector.broadcast %13 : vector<1x128xf32> to vector<256x128xf32>
      %15 = arith.addf %12, %14 : vector<256x128xf32>
      %cst_14 = arith.constant 0.000000e+00 : f32
      %16 = vector.broadcast %cst_14 : f32 to vector<256x128xf32>
      %17 = arith.maximumf %15, %16 : vector<256x128xf32>
      %c0_15 = arith.constant 0 : index
      %c0_16 = arith.constant 0 : index
      %18 = vector.load %arg6[%c0_15, %c0_16] : memref<256x128xf32, #tpu.memory_space<vmem>>, vector<256x128xf32>
      tpu.vector_store %arg6[%c0_15, %c0_16], %17 {strides = array<i32>} : memref<256x128xf32, #tpu.memory_space<vmem>>, vector<256x128xf32>,
    } else {
    }
    return
  }
  func.func @transform_0(%arg0: i32, %arg1: i32, %arg2: i32) -> (i32, i32) {
    %c0_i32 = arith.constant 0 : i32
    return %arg0, %arg2 : i32, i32
  }
  func.func @transform_1(%arg0: i32, %arg1: i32, %arg2: i32) -> (i32, i32) {
    %c0_i32 = arith.constant 0 : i32
    return %arg2, %arg1 : i32, i32
  }
  func.func @transform_2(%arg0: i32, %arg1: i32, %arg2: i32) -> (i32, i32) {
    %c0_i32 = arith.constant 0 : i32
    %c0_i32_0 = arith.constant 0 : i32
    return %c0_i32, %arg1 : i32, i32
  }
  func.func @transform_3(%arg0: i32, %arg1: i32, %arg2: i32) -> (i32, i32) {
    %c0_i32 = arith.constant 0 : i32
    return %arg0, %arg1 : i32, i32
  }
}

</mosaic_0001>

<llo_original>
// kernel: conv2d.1
$region0: #{conv2d.1}
  #allocation0 [shape = 'u32[]', space=smem, size = 0x4, offset = 0x4, fixed_abs, tag = 'smem constant byte address 0x4 - core index']
  #allocation1 [shape = 'u32[144,128]{1,0:T(1,128)}', space=vmem, size = 0x12000, scoped, tag = 'internal scratch']
  #allocation2 [shape = 'f32[256,128]{1,0:T(8,128)}', space=vmem, size = 0x20000, scoped, tag = 'scratch operand']
  %s0 = inlined_call_operand.vmem [shape: bf16[512,256], index: 0, kind: input, shape index: {}]
  %s1 = inlined_call_operand.vmem [shape: bf16[256,128], index: 1, kind: input, shape index: {}]
  %s2 = inlined_call_operand.vmem [shape: f32[1,128], index: 2, kind: input, shape index: {}]
  %s3 = inlined_call_operand.hbm [shape: f32[512,128], index: 3, kind: output, shape index: {}]
  %s4 = sld [smem:[#allocation0]]
  $region53: #{conv2d.1} parent=0
    _
  %s6 = ssub.s32 1, %s4
  %s7 = scalar_select 0, %s6, %s4
  $region1: #{conv2d.1} parent=0
    #allocation3 [shape = 'u8[262144]{0}', space=vmem, size = 0x40000, scoped, tag = 'output window, operand 0']
    #allocation4 [shape = 's32[2]{0}', space=sflag, size = 0x8, scoped, tag = 'scoped memory for conv2d.1']
    %8 = vsyncpa [#allocation4], 0
    %s9 = scalar_lea.sflag [#allocation4], 1
    %10 = vsyncpa %s9, 0
    loop: start=0, step=1, limit=4
    $region2: #{conv2d.1} parent=1 // loop_pre_header
      _
    $region3: #{conv2d.1} parent=1 // loop_header
      %s12 = sphi 0, %s16
      %p13 = scmp.ge.s32.totalorder %s12, 4
      %s19 = sphi 0, %s38
      %s20 = sphi 0, %s34
      %s21 = sphi 0, %s30
      %s22 = sphi 0, %s19
      %s23 = sphi 0, %s20
      %s24 = sphi 0, %s21
      %s25 = sphi 0, %s22
      %s26 = sphi 0, %s23
      %s27 = sphi 0, %s24
      %s43 = sphi 0, %s45
      %s46 = sphi 0, %s43
      %s47 = sphi 0, %s46
      %s63 = sphi 0, %s47
      %s71 = sphi 0, %s73
      %s74 = sphi 0, %s71
      %s75 = sphi 0, %s74
      %s91 = sphi 0, %s75
      %s97 = sphi 0, %s99
      %s100 = sphi 0, %s97
      %s101 = sphi 0, %s100
      %s117 = sphi 0, %s101
      %s125 = sphi 0, %s127
      %s128 = sphi 0, %s125
      %s129 = sphi 0, %s128
      %s145 = sphi 0, %s129
    $region4: #{conv2d.1} parent=1 // loop_header_branch
      %15 = sbr.rel (%p13) target = $region8
    $region5: #{conv2d.1} parent=1 // loop_body
      %s17 = ssub.s32 %s12, 1
      %s18 = ssub.s32 %s12, 2
      %s28 = sadd.s32 1, %s21
      %p29 = scmp.ge.s32.totalorder %s28, 1
      %s30 = scalar_select %p29, 0, %s28
      %s31 = sadd.s32 1, %s20
      %s32 = scalar_select %p29, %s31, %s20
      %p33 = scmp.ge.s32.totalorder %s32, 1
      %s34 = scalar_select %p33, 0, %s32
      %s35 = sadd.s32 1, %s19
      %s36 = scalar_select %p33, %s35, %s19
      %p37 = scmp.ge.s32.totalorder %s36, 2
      %s38 = scalar_select %p37, 0, %s36
      %s39 = ssub.s32 %s19, %s38
      %s40 = ssub.s32 %s21, %s30
      %s41 = sor.u32 %s39, %s40
      %p42 = scmp.eq.s32.totalorder %s41, 0
      %s44 = sadd.s32 %s43, 1
      %s45 = scalar_select %p42, %s43, %s44
      %p48 = pneg %p42
      %p49 = scmp.eq.s32.totalorder %s12, 1
      %p50 = por %p48, %p49
      %p51 = scmp.ne.s32.totalorder %s43, %s46
      %p52 = scmp.eq.s32.totalorder %s12, 0
      %p53 = por %p51, %p52
      %p54 = scmp.ne.s32.totalorder %s43, %s46
      %p55 = scmp.eq.s32.totalorder %s17, 1
      %p56 = por %p54, %p55
      %p57 = scmp.ne.s32.totalorder %s46, %s47
      %p58 = scmp.eq.s32.totalorder %s17, 0
      %p59 = por %p57, %p58
      %p60 = scmp.ne.s32.totalorder %s46, %s47
      %p61 = scmp.eq.s32.totalorder %s18, 1
      %p62 = por %p60, %p61
      %p64 = scmp.ne.s32.totalorder %s47, %s63
      %p65 = scmp.eq.s32.totalorder %s18, 0
      %p66 = por %p64, %p65
      %s67 = ssub.s32 %s21, %s30
      %s68 = ssub.s32 %s20, %s34
      %s69 = sor.u32 %s67, %s68
      %p70 = scmp.eq.s32.totalorder %s69, 0
      %s72 = sadd.s32 %s71, 1
      %s73 = scalar_select %p70, %s71, %s72
      %p76 = pneg %p70
      %p77 = scmp.eq.s32.totalorder %s12, 1
      %p78 = por %p76, %p77
      %p79 = scmp.ne.s32.totalorder %s71, %s74
      %p80 = scmp.eq.s32.totalorder %s12, 0
      %p81 = por %p79, %p80
      %p82 = scmp.ne.s32.totalorder %s71, %s74
      %p83 = scmp.eq.s32.totalorder %s17, 1
      %p84 = por %p82, %p83
      %p85 = scmp.ne.s32.totalorder %s74, %s75
      %p86 = scmp.eq.s32.totalorder %s17, 0
      %p87 = por %p85, %p86
      %p88 = scmp.ne.s32.totalorder %s74, %s75
      %p89 = scmp.eq.s32.totalorder %s18, 1
      %p90 = por %p88, %p89
      %p92 = scmp.ne.s32.totalorder %s75, %s91
      %p93 = scmp.eq.s32.totalorder %s18, 0
      %p94 = por %p92, %p93
      %s95 = ssub.s32 %s20, %s34
      %p96 = scmp.eq.s32.totalorder %s95, 0
      %s98 = sadd.s32 %s97, 1
      %s99 = scalar_select %p96, %s97, %s98
      %p102 = pneg %p96
      %p103 = scmp.eq.s32.totalorder %s12, 1
      %p104 = por %p102, %p103
      %p105 = scmp.ne.s32.totalorder %s97, %s100
      %p106 = scmp.eq.s32.totalorder %s12, 0
      %p107 = por %p105, %p106
      %p108 = scmp.ne.s32.totalorder %s97, %s100
      %p109 = scmp.eq.s32.totalorder %s17, 1
      %p110 = por %p108, %p109
      %p111 = scmp.ne.s32.totalorder %s100, %s101
      %p112 = scmp.eq.s32.totalorder %s17, 0
      %p113 = por %p111, %p112
      %p114 = scmp.ne.s32.totalorder %s100, %s101
      %p115 = scmp.eq.s32.totalorder %s18, 1
      %p116 = por %p114, %p115
      %p118 = scmp.ne.s32.totalorder %s101, %s117
      %p119 = scmp.eq.s32.totalorder %s18, 0
      %p120 = por %p118, %p119
      %s121 = ssub.s32 %s19, %s38
      %s122 = ssub.s32 %s20, %s34
      %s123 = sor.u32 %s121, %s122
      %p124 = scmp.eq.s32.totalorder %s123, 0
      %s126 = sadd.s32 %s125, 1
      %s127 = scalar_select %p124, %s125, %s126
      %p130 = pneg %p124
      %p131 = scmp.eq.s32.totalorder %s12, 1
      %p132 = por %p130, %p131
      %p133 = scmp.ne.s32.totalorder %s125, %s128
      %p134 = scmp.eq.s32.totalorder %s12, 0
      %p135 = por %p133, %p134
      %p136 = scmp.ne.s32.totalorder %s125, %s128
      %p137 = scmp.eq.s32.totalorder %s17, 1
      %p138 = por %p136, %p137
      %p139 = scmp.ne.s32.totalorder %s128, %s129
      %p140 = scmp.eq.s32.totalorder %s17, 0
      %p141 = por %p139, %p140
      %p142 = scmp.ne.s32.totalorder %s128, %s129
      %p143 = scmp.eq.s32.totalorder %s18, 1
      %p144 = por %p142, %p143
      %p146 = scmp.ne.s32.totalorder %s129, %s145
      %p147 = scmp.eq.s32.totalorder %s18, 0
      %p148 = por %p146, %p147
      %p149 = scmp.le.s32.totalorder 1, %s12
      %p150 = scmp.lt.s32.totalorder %s12, 3
      %p151 = pnand %p149, %p150
      %p152 = pneg %p151
      // Predicated region
      $region9: #{conv2d.1} parent=5 // pred_check
        _
      $region10: #{conv2d.1} parent=5 // pred_check_branch
        %154 = sbr.rel (%p151) target = $region12
      $region11: #{conv2d.1} parent=5 // pred_region
        %s155 = ssub.s32 %s12, 1
        // Predicated region
        $region13: #{conv2d.1} parent=11 // pred_check
          %p156 = pneg %p87
        $region14: #{conv2d.1} parent=11 // pred_check_branch
          %158 = sbr.rel (%p156) target = $region16
        $region15: #{conv2d.1} parent=11 // pred_region
          %s159 = smul.u32 32, %s24
          %p160 = scmp.lt.s32.totalorder %s159, 31
          %s161 = scalar_select %p160, %s159, 31
          %p162 = scmp.lt.s32.totalorder %s23, 0
          %s163 = scalar_select %p162, %s23, 0
          %s164 = sadd.s32 %s163, %s161
          %s165 = smul.addr %s164, 4
          %s166 = scalar_lea.vmem %s1, %s165
          %s167 = smul.u32 32, %s24
        $region16: #{conv2d.1} parent=11 // pred_fallthru
          _
        // Predicated region
        $region17: #{conv2d.1} parent=11 // pred_check
          %p168 = pneg %p113
        $region18: #{conv2d.1} parent=11 // pred_check_branch
          %170 = sbr.rel (%p168) target = $region20
        $region19: #{conv2d.1} parent=11 // pred_region
          %p171 = scmp.lt.s32.totalorder %s23, 0
          %s172 = scalar_select %p171, %s23, 0
          %s173 = scalar_lea.vmem %s2, %s172
        $region20: #{conv2d.1} parent=11 // pred_fallthru
          _
      $region12: #{conv2d.1} parent=5 // pred_fallthru
        _
      %p174 = scmp.lt.s32.totalorder %s12, 2
      // Predicated region
      $region21: #{conv2d.1} parent=5 // pred_check
        %p175 = pneg %p174
      $region22: #{conv2d.1} parent=5 // pred_check_branch
        %177 = sbr.rel (%p175) target = $region24
      $region23: #{conv2d.1} parent=5 // pred_region
        // Predicated region
        $region25: #{conv2d.1} parent=23 // pred_check
          %p178 = pneg %p53
        $region26: #{conv2d.1} parent=23 // pred_check_branch
          %180 = sbr.rel (%p178) target = $region28
        $region27: #{conv2d.1} parent=23 // pred_region
          %s181 = smul.u32 32, %s19
          %s182 = smul.u32 2, %s21
          %p183 = scmp.lt.s32.totalorder %s181, 63
          %s184 = scalar_select %p183, %s181, 63
          %p185 = scmp.lt.s32.totalorder %s182, 1
          %s186 = scalar_select %p185, %s182, 1
          %s187 = smul.addr %s184, 2
          %s188 = sadd.s32 %s186, %s187
          %s189 = smul.addr %s188, 4
          %s190 = scalar_lea.vmem %s0, %s189
          %s191 = smul.u32 32, %s19
          %s192 = smul.u32 2, %s21
        $region28: #{conv2d.1} parent=23 // pred_fallthru
          _
      $region24: #{conv2d.1} parent=5 // pred_fallthru
        _
      %p193 = scmp.le.s32.totalorder 1, %s12
      %p194 = scmp.lt.s32.totalorder %s12, 3
      %p195 = pnand %p193, %p194
      %p196 = pneg %p195
      // Predicated region
      $region29: #{conv2d.1} parent=5 // pred_check
        _
      $region30: #{conv2d.1} parent=5 // pred_check_branch
        %198 = sbr.rel (%p195) target = $region32
      $region31: #{conv2d.1} parent=5 // pred_region
        %s199 = ssub.s32 %s12, 1
        %s200 = smul.u32 32, %s22
        %s201 = smul.u32 2, %s24
        %p202 = scmp.lt.s32.totalorder %s200, 63
        %s203 = scalar_select %p202, %s200, 63
        %p204 = scmp.lt.s32.totalorder %s201, 1
        %s205 = scalar_select %p204, %s201, 1
        %s206 = smul.addr %s203, 2
        %s207 = sadd.s32 %s205, %s206
        %s208 = smul.addr %s207, 4
        %s209 = scalar_lea.vmem %s0, %s208
        %p210 = pneg %p59
        %p211 = pneg %p56
        %s212 = smul.u32 32, %s24
        %p213 = scmp.lt.s32.totalorder %s212, 31
        %s214 = scalar_select %p213, %s212, 31
        %p215 = scmp.lt.s32.totalorder %s23, 0
        %s216 = scalar_select %p215, %s23, 0
        %s217 = sadd.s32 %s216, %s214
        %s218 = smul.addr %s217, 4
        %s219 = scalar_lea.vmem %s1, %s218
        %p220 = pneg %p87
        %p221 = pneg %p84
        %p222 = scmp.lt.s32.totalorder %s23, 0
        %s223 = scalar_select %p222, %s23, 0
        %s224 = scalar_lea.vmem %s2, %s223
        %p225 = pneg %p113
        %p226 = pneg %p110
        %p227 = pneg %p141
        %p228 = pneg %p138
        %s229 = sand.u32 %s128, 1
        %s230 = scalar_lea.sflag [#allocation4], %s229
        %s231 = sand.u32 %s128, 1
        %s232 = smul.addr %s231, 256
        %s233 = scalar_lea.vmem [#allocation3], %s232
        %s234 = smul.u32 32, %s22
        %s235 = smul.u32 2, %s24
        %p236 = scmp.lt.s32.totalorder %s234, 63
        %s237 = scalar_select %p236, %s234, 63
        %p238 = scmp.lt.s32.totalorder %s235, 1
        %s239 = scalar_select %p238, %s235, 1
        %s240 = smul.addr %s237, 2
        %s241 = sadd.s32 %s239, %s240
        %s242 = smul.addr %s241, 4
        %s243 = scalar_lea.vmem %s0, %s242
        %s244 = smul.u32 32, %s22
        %s245 = smul.u32 2, %s24
        %s246 = smul.u32 32, %s24
        %p247 = scmp.lt.s32.totalorder %s246, 31
        %s248 = scalar_select %p247, %s246, 31
        %p249 = scmp.lt.s32.totalorder %s23, 0
        %s250 = scalar_select %p249, %s23, 0
        %s251 = sadd.s32 %s250, %s248
        %s252 = smul.addr %s251, 4
        %s253 = scalar_lea.vmem %s1, %s252
        %s254 = smul.u32 32, %s24
        %p255 = scmp.lt.s32.totalorder %s23, 0
        %s256 = scalar_select %p255, %s23, 0
        %s257 = scalar_lea.vmem %s2, %s256
        %s258 = smul.u32 32, %s22
        %p260 = scmp.eq.s32.totalorder %s24, 0
        // Predicated region
        $region33: #{conv2d.1} parent=31 // pred_check
          %p261 = pneg %p260
        $region34: #{conv2d.1} parent=31 // pred_check_branch
          %263 = sbr.rel (%p261) target = $region36
        $region35: #{conv2d.1} parent=31 // pred_region
          %264 = vst [vmem:[#allocation2] sm:$0xff] 0.0
          %265 = vst [vmem:[#allocation2 + $0x8] sm:$0xff] 0.0
          %266 = vst [vmem:[#allocation2 + $0x10] sm:$0xff] 0.0
          %267 = vst [vmem:[#allocation2 + $0x18] sm:$0xff] 0.0
          %268 = vst [vmem:[#allocation2 + $0x20] sm:$0xff] 0.0
          %269 = vst [vmem:[#allocation2 + $0x28] sm:$0xff] 0.0
          %270 = vst [vmem:[#allocation2 + $0x30] sm:$0xff] 0.0
          %271 = vst [vmem:[#allocation2 + $0x38] sm:$0xff] 0.0
          %272 = vst [vmem:[#allocation2 + $0x40] sm:$0xff] 0.0
          %273 = vst [vmem:[#allocation2 + $0x48] sm:$0xff] 0.0
          %274 = vst [vmem:[#allocation2 + $0x50] sm:$0xff] 0.0
          %275 = vst [vmem:[#allocation2 + $0x58] sm:$0xff] 0.0
          %276 = vst [vmem:[#allocation2 + $0x60] sm:$0xff] 0.0
          %277 = vst [vmem:[#allocation2 + $0x68] sm:$0xff] 0.0
          %278 = vst [vmem:[#allocation2 + $0x70] sm:$0xff] 0.0
          %279 = vst [vmem:[#allocation2 + $0x78] sm:$0xff] 0.0
          %280 = vst [vmem:[#allocation2 + $0x80] sm:$0xff] 0.0
          %281 = vst [vmem:[#allocation2 + $0x88] sm:$0xff] 0.0
          %282 = vst [vmem:[#allocation2 + $0x90] sm:$0xff] 0.0
          %283 = vst [vmem:[#allocation2 + $0x98] sm:$0xff] 0.0
          %284 = vst [vmem:[#allocation2 + $0xa0] sm:$0xff] 0.0
          %285 = vst [vmem:[#allocation2 + $0xa8] sm:$0xff] 0.0
          %286 = vst [vmem:[#allocation2 + $0xb0] sm:$0xff] 0.0
          %287 = vst [vmem:[#allocation2 + $0xb8] sm:$0xff] 0.0
          %288 = vst [vmem:[#allocation2 + $0xc0] sm:$0xff] 0.0
          %289 = vst [vmem:[#allocation2 + $0xc8] sm:$0xff] 0.0
          %290 = vst [vmem:[#allocation2 + $0xd0] sm:$0xff] 0.0
          %291 = vst [vmem:[#allocation2 + $0xd8] sm:$0xff] 0.0
          %292 = vst [vmem:[#allocation2 + $0xe0] sm:$0xff] 0.0
          %293 = vst [vmem:[#allocation2 + $0xe8] sm:$0xff] 0.0
          %294 = vst [vmem:[#allocation2 + $0xf0] sm:$0xff] 0.0
          %295 = vst [vmem:[#allocation2 + $0xf8] sm:$0xff] 0.0
        $region36: #{conv2d.1} parent=31 // pred_fallthru
          _
        %v296 = vld [vmem:[#allocation2] sm:$0xff]
        %v297 = vld [vmem:[#allocation2 + $0x8] sm:$0xff]
        %v298 = vld [vmem:[#allocation2 + $0x10] sm:$0xff]
        %v299 = vld [vmem:[#allocation2 + $0x18] sm:$0xff]
        %v300 = vld [vmem:[#allocation2 + $0x20] sm:$0xff]
        %v301 = vld [vmem:[#allocation2 + $0x28] sm:$0xff]
        %v302 = vld [vmem:[#allocation2 + $0x30] sm:$0xff]
        %v303 = vld [vmem:[#allocation2 + $0x38] sm:$0xff]
        %v304 = vld [vmem:[#allocation2 + $0x40] sm:$0xff]
        %v305 = vld [vmem:[#allocation2 + $0x48] sm:$0xff]
        %v306 = vld [vmem:[#allocation2 + $0x50] sm:$0xff]
        %v307 = vld [vmem:[#allocation2 + $0x58] sm:$0xff]
        %v308 = vld [vmem:[#allocation2 + $0x60] sm:$0xff]
        %v309 = vld [vmem:[#allocation2 + $0x68] sm:$0xff]
        %v310 = vld [vmem:[#allocation2 + $0x70] sm:$0xff]
        %v311 = vld [vmem:[#allocation2 + $0x78] sm:$0xff]
        %v312 = vld [vmem:[#allocation2 + $0x80] sm:$0xff]
        %v313 = vld [vmem:[#allocation2 + $0x88] sm:$0xff]
        %v314 = vld [vmem:[#allocation2 + $0x90] sm:$0xff]
        %v315 = vld [vmem:[#allocation2 + $0x98] sm:$0xff]
        %v316 = vld [vmem:[#allocation2 + $0xa0] sm:$0xff]
        %v317 = vld [vmem:[#allocation2 + $0xa8] sm:$0xff]
        %v318 = vld [vmem:[#allocation2 + $0xb0] sm:$0xff]
        %v319 = vld [vmem:[#allocation2 + $0xb8] sm:$0xff]
        %v320 = vld [vmem:[#allocation2 + $0xc0] sm:$0xff]
        %v321 = vld [vmem:[#allocation2 + $0xc8] sm:$0xff]
        %v322 = vld [vmem:[#allocation2 + $0xd0] sm:$0xff]
        %v323 = vld [vmem:[#allocation2 + $0xd8] sm:$0xff]
        %v324 = vld [vmem:[#allocation2 + $0xe0] sm:$0xff]
        %v325 = vld [vmem:[#allocation2 + $0xe8] sm:$0xff]
        %v326 = vld [vmem:[#allocation2 + $0xf0] sm:$0xff]
        %v327 = vld [vmem:[#allocation2 + $0xf8] sm:$0xff]
        %v328 = vld [vmem:[%s243] sm:$0xff]
        %v329 = vld [vmem:[%s243 + $0x8] sm:$0xff]
        %v330 = vld [vmem:[%s243 + $0x10] sm:$0xff]
        %v331 = vld [vmem:[%s243 + $0x18] sm:$0xff]
        %v332 = vld [vmem:[%s243 + $0x20] sm:$0xff]
        %v333 = vld [vmem:[%s243 + $0x28] sm:$0xff]
        %v334 = vld [vmem:[%s243 + $0x30] sm:$0xff]
        %v335 = vld [vmem:[%s243 + $0x38] sm:$0xff]
        %v336 = vld [vmem:[%s243 + $0x40] sm:$0xff]
        %v337 = vld [vmem:[%s243 + $0x48] sm:$0xff]
        %v338 = vld [vmem:[%s243 + $0x50] sm:$0xff]
        %v339 = vld [vmem:[%s243 + $0x58] sm:$0xff]
        %v340 = vld [vmem:[%s243 + $0x60] sm:$0xff]
        %v341 = vld [vmem:[%s243 + $0x68] sm:$0xff]
        %v342 = vld [vmem:[%s243 + $0x70] sm:$0xff]
        %v343 = vld [vmem:[%s243 + $0x78] sm:$0xff]
        %v344 = vld [vmem:[%s243 + $0x80] sm:$0xff]
        %v345 = vld [vmem:[%s243 + $0x88] sm:$0xff]
        %v346 = vld [vmem:[%s243 + $0x90] sm:$0xff]
        %v347 = vld [vmem:[%s243 + $0x98] sm:$0xff]
        %v348 = vld [vmem:[%s243 + $0xa0] sm:$0xff]
        %v349 = vld [vmem:[%s243 + $0xa8] sm:$0xff]
        %v350 = vld [vmem:[%s243 + $0xb0] sm:$0xff]
        %v351 = vld [vmem:[%s243 + $0xb8] sm:$0xff]
        %v352 = vld [vmem:[%s243 + $0xc0] sm:$0xff]
        %v353 = vld [vmem:[%s243 + $0xc8] sm:$0xff]
        %v354 = vld [vmem:[%s243 + $0xd0] sm:$0xff]
        %v355 = vld [vmem:[%s243 + $0xd8] sm:$0xff]
        %v356 = vld [vmem:[%s243 + $0xe0] sm:$0xff]
        %v357 = vld [vmem:[%s243 + $0xe8] sm:$0xff]
        %v358 = vld [vmem:[%s243 + $0xf0] sm:$0xff]
        %v359 = vld [vmem:[%s243 + $0xf8] sm:$0xff]
        %v360 = vld [vmem:[%s253] sm:$0xf]
        %v361 = vld [vmem:[%s253 + $0x4] sm:$0xf]
        %v362 = vld [vmem:[%s253 + $0x8] sm:$0xf]
        %v363 = vld [vmem:[%s253 + $0xc] sm:$0xf]
        %v364 = vld [vmem:[%s253 + $0x10] sm:$0xf]
        %v365 = vld [vmem:[%s253 + $0x14] sm:$0xf]
        %v366 = vld [vmem:[%s253 + $0x18] sm:$0xf]
        %v367 = vld [vmem:[%s253 + $0x1c] sm:$0xf]
        %v368 = vld [vmem:[%s253 + $0x20] sm:$0xf]
        %v369 = vld [vmem:[%s253 + $0x24] sm:$0xf]
        %v370 = vld [vmem:[%s253 + $0x28] sm:$0xf]
        %v371 = vld [vmem:[%s253 + $0x2c] sm:$0xf]
        %v372 = vld [vmem:[%s253 + $0x30] sm:$0xf]
        %v373 = vld [vmem:[%s253 + $0x34] sm:$0xf]
        %v374 = vld [vmem:[%s253 + $0x38] sm:$0xf]
        %v375 = vld [vmem:[%s253 + $0x3c] sm:$0xf]
        %v376 = vld [vmem:[%s253 + $0x40] sm:$0xf]
        %v377 = vld [vmem:[%s253 + $0x44] sm:$0xf]
        %v378 = vld [vmem:[%s253 + $0x48] sm:$0xf]
        %v379 = vld [vmem:[%s253 + $0x4c] sm:$0xf]
        %v380 = vld [vmem:[%s253 + $0x50] sm:$0xf]
        %v381 = vld [vmem:[%s253 + $0x54] sm:$0xf]
        %v382 = vld [vmem:[%s253 + $0x58] sm:$0xf]
        %v383 = vld [vmem:[%s253 + $0x5c] sm:$0xf]
        %v384 = vld [vmem:[%s253 + $0x60] sm:$0xf]
        %v385 = vld [vmem:[%s253 + $0x64] sm:$0xf]
        %v386 = vld [vmem:[%s253 + $0x68] sm:$0xf]
        %v387 = vld [vmem:[%s253 + $0x6c] sm:$0xf]
        %v388 = vld [vmem:[%s253 + $0x70] sm:$0xf]
        %v389 = vld [vmem:[%s253 + $0x74] sm:$0xf]
        %v390 = vld [vmem:[%s253 + $0x78] sm:$0xf]
        %v391 = vld [vmem:[%s253 + $0x7c] sm:$0xf]
        %v424 = vunpack.c.l.b16 %v328
        %v425 = vunpack.c.h.b16 %v328
        %v426 = vunpack.c.l.b16 %v329
        %v427 = vunpack.c.h.b16 %v329
        %v428 = vunpack.c.l.b16 %v330
        %v429 = vunpack.c.h.b16 %v330
        %v430 = vunpack.c.l.b16 %v331
        %v431 = vunpack.c.h.b16 %v331
        %v432 = vunpack.c.l.b16 %v332
        %v433 = vunpack.c.h.b16 %v332
        %v434 = vunpack.c.l.b16 %v333
        %v435 = vunpack.c.h.b16 %v333
        %v436 = vunpack.c.l.b16 %v334
        %v437 = vunpack.c.h.b16 %v334
        %v438 = vunpack.c.l.b16 %v335
        %v439 = vunpack.c.h.b16 %v335
        %v440 = vunpack.c.l.b16 %v336
        %v441 = vunpack.c.h.b16 %v336
        %v442 = vunpack.c.l.b16 %v337
        %v443 = vunpack.c.h.b16 %v337
        %v444 = vunpack.c.l.b16 %v338
        %v445 = vunpack.c.h.b16 %v338
        %v446 = vunpack.c.l.b16 %v339
        %v447 = vunpack.c.h.b16 %v339
        %v448 = vunpack.c.l.b16 %v340
        %v449 = vunpack.c.h.b16 %v340
        %v450 = vunpack.c.l.b16 %v341
        %v451 = vunpack.c.h.b16 %v341
        %v452 = vunpack.c.l.b16 %v342
        %v453 = vunpack.c.h.b16 %v342
        %v454 = vunpack.c.l.b16 %v343
        %v455 = vunpack.c.h.b16 %v343
        %v456 = vunpack.c.l.b16 %v344
        %v457 = vunpack.c.h.b16 %v344
        %v458 = vunpack.c.l.b16 %v345
        %v459 = vunpack.c.h.b16 %v345
        %v460 = vunpack.c.l.b16 %v346
        %v461 = vunpack.c.h.b16 %v346
        %v462 = vunpack.c.l.b16 %v347
        %v463 = vunpack.c.h.b16 %v347
        %v464 = vunpack.c.l.b16 %v348
        %v465 = vunpack.c.h.b16 %v348
        %v466 = vunpack.c.l.b16 %v349
        %v467 = vunpack.c.h.b16 %v349
        %v468 = vunpack.c.l.b16 %v350
        %v469 = vunpack.c.h.b16 %v350
        %v470 = vunpack.c.l.b16 %v351
        %v471 = vunpack.c.h.b16 %v351
        %v472 = vunpack.c.l.b16 %v352
        %v473 = vunpack.c.h.b16 %v352
        %v474 = vunpack.c.l.b16 %v353
        %v475 = vunpack.c.h.b16 %v353
        %v476 = vunpack.c.l.b16 %v354
        %v477 = vunpack.c.h.b16 %v354
        %v478 = vunpack.c.l.b16 %v355
        %v479 = vunpack.c.h.b16 %v355
        %v480 = vunpack.c.l.b16 %v356
        %v481 = vunpack.c.h.b16 %v356
        %v482 = vunpack.c.l.b16 %v357
        %v483 = vunpack.c.h.b16 %v357
        %v484 = vunpack.c.l.b16 %v358
        %v485 = vunpack.c.h.b16 %v358
        %v486 = vunpack.c.l.b16 %v359
        %v487 = vunpack.c.h.b16 %v359
        %v488 = vpack.c.b16 %v426, %v424
        %v489 = vpack.c.b16 %v427, %v425
        %v490 = vpack.c.b16 %v430, %v428
        %v491 = vpack.c.b16 %v431, %v429
        %v492 = vpack.c.b16 %v434, %v432
        %v493 = vpack.c.b16 %v435, %v433
        %v494 = vpack.c.b16 %v438, %v436
        %v495 = vpack.c.b16 %v439, %v437
        %v496 = vpack.c.b16 %v442, %v440
        %v497 = vpack.c.b16 %v443, %v441
        %v498 = vpack.c.b16 %v446, %v444
        %v499 = vpack.c.b16 %v447, %v445
        %v500 = vpack.c.b16 %v450, %v448
        %v501 = vpack.c.b16 %v451, %v449
        %v502 = vpack.c.b16 %v454, %v452
        %v503 = vpack.c.b16 %v455, %v453
        %v504 = vpack.c.b16 %v458, %v456
        %v505 = vpack.c.b16 %v459, %v457
        %v506 = vpack.c.b16 %v462, %v460
        %v507 = vpack.c.b16 %v463, %v461
        %v508 = vpack.c.b16 %v466, %v464
        %v509 = vpack.c.b16 %v467, %v465
        %v510 = vpack.c.b16 %v470, %v468
        %v511 = vpack.c.b16 %v471, %v469
        %v512 = vpack.c.b16 %v474, %v472
        %v513 = vpack.c.b16 %v475, %v473
        %v514 = vpack.c.b16 %v478, %v476
        %v515 = vpack.c.b16 %v479, %v477
        %v516 = vpack.c.b16 %v482, %v480
        %v517 = vpack.c.b16 %v483, %v481
        %v518 = vpack.c.b16 %v486, %v484
        %v519 = vpack.c.b16 %v487, %v485
        %v584 = vunpack.c.l.b16 %v360
        %v585 = vunpack.c.l.b16 %v361
        %v586 = vunpack.c.l.b16 %v362
        %v587 = vunpack.c.l.b16 %v363
        %v588 = vunpack.c.l.b16 %v364
        %v589 = vunpack.c.l.b16 %v365
        %v590 = vunpack.c.l.b16 %v366
        %v591 = vunpack.c.l.b16 %v367
        %v592 = vunpack.c.l.b16 %v368
        %v593 = vunpack.c.l.b16 %v369
        %v594 = vunpack.c.l.b16 %v370
        %v595 = vunpack.c.l.b16 %v371
        %v596 = vunpack.c.l.b16 %v372
        %v597 = vunpack.c.l.b16 %v373
        %v598 = vunpack.c.l.b16 %v374
        %v599 = vunpack.c.l.b16 %v375
        %v600 = vunpack.c.l.b16 %v376
        %v601 = vunpack.c.l.b16 %v377
        %v602 = vunpack.c.l.b16 %v378
        %v603 = vunpack.c.l.b16 %v379
        %v604 = vunpack.c.l.b16 %v380
        %v605 = vunpack.c.l.b16 %v381
        %v606 = vunpack.c.l.b16 %v382
        %v607 = vunpack.c.l.b16 %v383
        %v608 = vunpack.c.l.b16 %v384
        %v609 = vunpack.c.l.b16 %v385
        %v610 = vunpack.c.l.b16 %v386
        %v611 = vunpack.c.l.b16 %v387
        %v612 = vunpack.c.l.b16 %v388
        %v613 = vunpack.c.l.b16 %v389
        %v614 = vunpack.c.l.b16 %v390
        %v615 = vunpack.c.l.b16 %v391
        %v616 = vpack.c.b16 %v585, %v584
        %v617 = vpack.c.b16 %v587, %v586
        %v618 = vpack.c.b16 %v589, %v588
        %v619 = vpack.c.b16 %v591, %v590
        %v620 = vpack.c.b16 %v593, %v592
        %v621 = vpack.c.b16 %v595, %v594
        %v622 = vpack.c.b16 %v597, %v596
        %v623 = vpack.c.b16 %v599, %v598
        %v624 = vpack.c.b16 %v601, %v600
        %v625 = vpack.c.b16 %v603, %v602
        %v626 = vpack.c.b16 %v605, %v604
        %v627 = vpack.c.b16 %v607, %v606
        %v628 = vpack.c.b16 %v609, %v608
        %v629 = vpack.c.b16 %v611, %v610
        %v630 = vpack.c.b16 %v613, %v612
        %v631 = vpack.c.b16 %v615, %v614
        %648 = vmatprep.subr.bf16.mxu0 0
        %649 = vmatpush1.bf16.msra.mxu0 %v623
        %650 = vmatprep.subr.bf16.mxu0 0
        %651 = vmatpush1.bf16.msra.mxu0 %v622
        %652 = vmatprep.subr.bf16.mxu0 0
        %653 = vmatpush1.bf16.msra.mxu0 %v621
        %654 = vmatprep.subr.bf16.mxu0 0
        %655 = vmatpush1.bf16.msra.mxu0 %v620
        %656 = vmatprep.subr.bf16.mxu0 0
        %657 = vmatpush1.bf16.msra.mxu0 %v619
        %658 = vmatprep.subr.bf16.mxu0 0
        %659 = vmatpush1.bf16.msra.mxu0 %v618
        %660 = vmatprep.subr.bf16.mxu0 0
        %661 = vmatpush1.bf16.msra.mxu0 %v617
        %662 = vmatprep.subr.bf16.mxu0 0
        %663 = vmatpush1.bf16.msra.mxu0 %v616
        %664 = vmatprep.subr.bf16.mxu0 0
        %665 = vmatpush2.bf16.msra.mxu0 %v631
        %666 = vmatprep.subr.bf16.mxu0 0
        %667 = vmatpush2.bf16.msra.mxu0 %v630
        %668 = vmatprep.subr.bf16.mxu0 0
        %669 = vmatpush2.bf16.msra.mxu0 %v629
        %670 = vmatprep.subr.bf16.mxu0 0
        %671 = vmatpush2.bf16.msra.mxu0 %v628
        %672 = vmatprep.subr.bf16.mxu0 0
        %673 = vmatpush2.bf16.msra.mxu0 %v627
        %674 = vmatprep.subr.bf16.mxu0 0
        %675 = vmatpush2.bf16.msra.mxu0 %v626
        %676 = vmatprep.subr.bf16.mxu0 0
        %677 = vmatpush2.bf16.msra.mxu0 %v625
        %678 = vmatprep.subr.bf16.mxu0 0
        %679 = vmatpush2.bf16.msra.mxu0 %v624
        %680 = vmatprep.mubr.bf16.mxu0 %v489
        %681 = vmatmul.mubr.bf16.gmra.mxu0 %v488
        %v682 = vpop.f32.mrf.mxu0
        %v683 = vadd.f32 0.0, %v682
        %v684 = vpop.f32.mrf.mxu0
        %v685 = vpop.f32.mrf.mxu0
        %v686 = vadd.f32 0.0, %v685
        %v687 = vpop.f32.mrf.mxu0
        %688 = vmatprep.mubr.bf16.mxu0 %v491
        %689 = vmatmul.mubr.bf16.gmra.mxu0 %v490
        %v690 = vpop.f32.mrf.mxu0
        %v691 = vadd.f32 0.0, %v690
        %v692 = vpop.f32.mrf.mxu0
        %v693 = vpop.f32.mrf.mxu0
        %v694 = vadd.f32 0.0, %v693
        %v695 = vpop.f32.mrf.mxu0
        %696 = vmatprep.mubr.bf16.mxu0 %v493
        %697 = vmatmul.mubr.bf16.gmra.mxu0 %v492
        %v698 = vpop.f32.mrf.mxu0
        %v699 = vadd.f32 0.0, %v698
        %v700 = vpop.f32.mrf.mxu0
        %v701 = vpop.f32.mrf.mxu0
        %v702 = vadd.f32 0.0, %v701
        %v703 = vpop.f32.mrf.mxu0
        %704 = vmatprep.mubr.bf16.mxu0 %v495
        %705 = vmatmul.mubr.bf16.gmra.mxu0 %v494
        %v706 = vpop.f32.mrf.mxu0
        %v707 = vadd.f32 0.0, %v706
        %v708 = vpop.f32.mrf.mxu0
        %v709 = vpop.f32.mrf.mxu0
        %v710 = vadd.f32 0.0, %v709
        %v711 = vpop.f32.mrf.mxu0
        %712 = vmatprep.mubr.bf16.mxu0 %v497
        %713 = vmatmul.mubr.bf16.gmra.mxu0 %v496
        %v714 = vpop.f32.mrf.mxu0
        %v715 = vadd.f32 0.0, %v714
        %v716 = vpop.f32.mrf.mxu0
        %v717 = vpop.f32.mrf.mxu0
        %v718 = vadd.f32 0.0, %v717
        %v719 = vpop.f32.mrf.mxu0
        %720 = vmatprep.mubr.bf16.mxu0 %v499
        %721 = vmatmul.mubr.bf16.gmra.mxu0 %v498
        %v722 = vpop.f32.mrf.mxu0
        %v723 = vadd.f32 0.0, %v722
        %v724 = vpop.f32.mrf.mxu0
        %v725 = vpop.f32.mrf.mxu0
        %v726 = vadd.f32 0.0, %v725
        %v727 = vpop.f32.mrf.mxu0
        %728 = vmatprep.mubr.bf16.mxu0 %v501
        %729 = vmatmul.mubr.bf16.gmra.mxu0 %v500
        %v730 = vpop.f32.mrf.mxu0
        %v731 = vadd.f32 0.0, %v730
        %v732 = vpop.f32.mrf.mxu0
        %v733 = vpop.f32.mrf.mxu0
        %v734 = vadd.f32 0.0, %v733
        %v735 = vpop.f32.mrf.mxu0
        %736 = vmatprep.mubr.bf16.mxu0 %v503
        %737 = vmatmul.mubr.bf16.gmra.mxu0 %v502
        %v738 = vpop.f32.mrf.mxu0
        %v739 = vadd.f32 0.0, %v738
        %v740 = vpop.f32.mrf.mxu0
        %v741 = vpop.f32.mrf.mxu0
        %v742 = vadd.f32 0.0, %v741
        %v743 = vpop.f32.mrf.mxu0
        %744 = vmatprep.mubr.bf16.mxu0 %v505
        %745 = vmatmul.mubr.bf16.gmra.mxu0 %v504
        %v746 = vpop.f32.mrf.mxu0
        %v747 = vadd.f32 0.0, %v746
        %v748 = vpop.f32.mrf.mxu0
        %v749 = vpop.f32.mrf.mxu0
        %v750 = vadd.f32 0.0, %v749
        %v751 = vpop.f32.mrf.mxu0
        %752 = vmatprep.mubr.bf16.mxu0 %v507
        %753 = vmatmul.mubr.bf16.gmra.mxu0 %v506
        %v754 = vpop.f32.mrf.mxu0
        %v755 = vadd.f32 0.0, %v754
        %v756 = vpop.f32.mrf.mxu0
        %v757 = vpop.f32.mrf.mxu0
        %v758 = vadd.f32 0.0, %v757
        %v759 = vpop.f32.mrf.mxu0
        %760 = vmatprep.mubr.bf16.mxu0 %v509
        %761 = vmatmul.mubr.bf16.gmra.mxu0 %v508
        %v762 = vpop.f32.mrf.mxu0
        %v763 = vadd.f32 0.0, %v762
        %v764 = vpop.f32.mrf.mxu0
        %v765 = vpop.f32.mrf.mxu0
        %v766 = vadd.f32 0.0, %v765
        %v767 = vpop.f32.mrf.mxu0
        %768 = vmatprep.mubr.bf16.mxu0 %v511
        %769 = vmatmul.mubr.bf16.gmra.mxu0 %v510
        %v770 = vpop.f32.mrf.mxu0
        %v771 = vadd.f32 0.0, %v770
        %v772 = vpop.f32.mrf.mxu0
        %v773 = vpop.f32.mrf.mxu0
        %v774 = vadd.f32 0.0, %v773
        %v775 = vpop.f32.mrf.mxu0
        %776 = vmatprep.mubr.bf16.mxu0 %v513
        %777 = vmatmul.mubr.bf16.gmra.mxu0 %v512
        %v778 = vpop.f32.mrf.mxu0
        %v779 = vadd.f32 0.0, %v778
        %v780 = vpop.f32.mrf.mxu0
        %v781 = vpop.f32.mrf.mxu0
        %v782 = vadd.f32 0.0, %v781
        %v783 = vpop.f32.mrf.mxu0
        %784 = vmatprep.mubr.bf16.mxu0 %v515
        %785 = vmatmul.mubr.bf16.gmra.mxu0 %v514
        %v786 = vpop.f32.mrf.mxu0
        %v787 = vadd.f32 0.0, %v786
        %v788 = vpop.f32.mrf.mxu0
        %v789 = vpop.f32.mrf.mxu0
        %v790 = vadd.f32 0.0, %v789
        %v791 = vpop.f32.mrf.mxu0
        %792 = vmatprep.mubr.bf16.mxu0 %v517
        %793 = vmatmul.mubr.bf16.gmra.mxu0 %v516
        %v794 = vpop.f32.mrf.mxu0
        %v795 = vadd.f32 0.0, %v794
        %v796 = vpop.f32.mrf.mxu0
        %v797 = vpop.f32.mrf.mxu0
        %v798 = vadd.f32 0.0, %v797
        %v799 = vpop.f32.mrf.mxu0
        %800 = vmatprep.mubr.bf16.mxu0 %v519
        %801 = vmatmul.mubr.bf16.gmra.mxu0 %v518
        %v802 = vpop.f32.mrf.mxu0
        %v803 = vadd.f32 0.0, %v802
        %v804 = vpop.f32.mrf.mxu0
        %v805 = vpop.f32.mrf.mxu0
        %v806 = vadd.f32 0.0, %v805
        %v807 = vpop.f32.mrf.mxu0
        %808 = vdwg.mxu0
        %v809 = vadd.f32 %v296, %v683
        %v810 = vadd.f32 %v297, %v686
        %v811 = vadd.f32 %v298, %v691
        %v812 = vadd.f32 %v299, %v694
        %v813 = vadd.f32 %v300, %v699
        %v814 = vadd.f32 %v301, %v702
        %v815 = vadd.f32 %v302, %v707
        %v816 = vadd.f32 %v303, %v710
        %v817 = vadd.f32 %v304, %v715
        %v818 = vadd.f32 %v305, %v718
        %v819 = vadd.f32 %v306, %v723
        %v820 = vadd.f32 %v307, %v726
        %v821 = vadd.f32 %v308, %v731
        %v822 = vadd.f32 %v309, %v734
        %v823 = vadd.f32 %v310, %v739
        %v824 = vadd.f32 %v311, %v742
        %v825 = vadd.f32 %v312, %v747
        %v826 = vadd.f32 %v313, %v750
        %v827 = vadd.f32 %v314, %v755
        %v828 = vadd.f32 %v315, %v758
        %v829 = vadd.f32 %v316, %v763
        %v830 = vadd.f32 %v317, %v766
        %v831 = vadd.f32 %v318, %v771
        %v832 = vadd.f32 %v319, %v774
        %v833 = vadd.f32 %v320, %v779
        %v834 = vadd.f32 %v321, %v782
        %v835 = vadd.f32 %v322, %v787
        %v836 = vadd.f32 %v323, %v790
        %v837 = vadd.f32 %v324, %v795
        %v838 = vadd.f32 %v325, %v798
        %v839 = vadd.f32 %v326, %v803
        %v840 = vadd.f32 %v327, %v806
        %841 = vst [vmem:[#allocation2] sm:$0xff] %v809
        %842 = vst [vmem:[#allocation2 + $0x8] sm:$0xff] %v810
        %843 = vst [vmem:[#allocation2 + $0x10] sm:$0xff] %v811
        %844 = vst [vmem:[#allocation2 + $0x18] sm:$0xff] %v812
        %845 = vst [vmem:[#allocation2 + $0x20] sm:$0xff] %v813
        %846 = vst [vmem:[#allocation2 + $0x28] sm:$0xff] %v814
        %847 = vst [vmem:[#allocation2 + $0x30] sm:$0xff] %v815
        %848 = vst [vmem:[#allocation2 + $0x38] sm:$0xff] %v816
        %849 = vst [vmem:[#allocation2 + $0x40] sm:$0xff] %v817
        %850 = vst [vmem:[#allocation2 + $0x48] sm:$0xff] %v818
        %851 = vst [vmem:[#allocation2 + $0x50] sm:$0xff] %v819
        %852 = vst [vmem:[#allocation2 + $0x58] sm:$0xff] %v820
        %853 = vst [vmem:[#allocation2 + $0x60] sm:$0xff] %v821
        %854 = vst [vmem:[#allocation2 + $0x68] sm:$0xff] %v822
        %855 = vst [vmem:[#allocation2 + $0x70] sm:$0xff] %v823
        %856 = vst [vmem:[#allocation2 + $0x78] sm:$0xff] %v824
        %857 = vst [vmem:[#allocation2 + $0x80] sm:$0xff] %v825
        %858 = vst [vmem:[#allocation2 + $0x88] sm:$0xff] %v826
        %859 = vst [vmem:[#allocation2 + $0x90] sm:$0xff] %v827
        %860 = vst [vmem:[#allocation2 + $0x98] sm:$0xff] %v828
        %861 = vst [vmem:[#allocation2 + $0xa0] sm:$0xff] %v829
        %862 = vst [vmem:[#allocation2 + $0xa8] sm:$0xff] %v830
        %863 = vst [vmem:[#allocation2 + $0xb0] sm:$0xff] %v831
        %864 = vst [vmem:[#allocation2 + $0xb8] sm:$0xff] %v832
        %865 = vst [vmem:[#allocation2 + $0xc0] sm:$0xff] %v833
        %866 = vst [vmem:[#allocation2 + $0xc8] sm:$0xff] %v834
        %867 = vst [vmem:[#allocation2 + $0xd0] sm:$0xff] %v835
        %868 = vst [vmem:[#allocation2 + $0xd8] sm:$0xff] %v836
        %869 = vst [vmem:[#allocation2 + $0xe0] sm:$0xff] %v837
        %870 = vst [vmem:[#allocation2 + $0xe8] sm:$0xff] %v838
        %871 = vst [vmem:[#allocation2 + $0xf0] sm:$0xff] %v839
        %872 = vst [vmem:[#allocation2 + $0xf8] sm:$0xff] %v840
        // Predicated region
        $region37: #{conv2d.1} parent=31 // pred_check
          %p873 = pneg %p260
        $region38: #{conv2d.1} parent=31 // pred_check_branch
          %875 = sbr.rel (%p873) target = $region40
        $region39: #{conv2d.1} parent=31 // pred_region
          %v876 = vld [vmem:[#allocation2] sm:$0xff]
          %v877 = vld [vmem:[#allocation2 + $0x8] sm:$0xff]
          %v878 = vld [vmem:[#allocation2 + $0x10] sm:$0xff]
          %v879 = vld [vmem:[#allocation2 + $0x18] sm:$0xff]
          %v880 = vld [vmem:[#allocation2 + $0x20] sm:$0xff]
          %v881 = vld [vmem:[#allocation2 + $0x28] sm:$0xff]
          %v882 = vld [vmem:[#allocation2 + $0x30] sm:$0xff]
          %v883 = vld [vmem:[#allocation2 + $0x38] sm:$0xff]
          %v884 = vld [vmem:[#allocation2 + $0x40] sm:$0xff]
          %v885 = vld [vmem:[#allocation2 + $0x48] sm:$0xff]
          %v886 = vld [vmem:[#allocation2 + $0x50] sm:$0xff]
          %v887 = vld [vmem:[#allocation2 + $0x58] sm:$0xff]
          %v888 = vld [vmem:[#allocation2 + $0x60] sm:$0xff]
          %v889 = vld [vmem:[#allocation2 + $0x68] sm:$0xff]
          %v890 = vld [vmem:[#allocation2 + $0x70] sm:$0xff]
          %v891 = vld [vmem:[#allocation2 + $0x78] sm:$0xff]
          %v892 = vld [vmem:[#allocation2 + $0x80] sm:$0xff]
          %v893 = vld [vmem:[#allocation2 + $0x88] sm:$0xff]
          %v894 = vld [vmem:[#allocation2 + $0x90] sm:$0xff]
          %v895 = vld [vmem:[#allocation2 + $0x98] sm:$0xff]
          %v896 = vld [vmem:[#allocation2 + $0xa0] sm:$0xff]
          %v897 = vld [vmem:[#allocation2 + $0xa8] sm:$0xff]
          %v898 = vld [vmem:[#allocation2 + $0xb0] sm:$0xff]
          %v899 = vld [vmem:[#allocation2 + $0xb8] sm:$0xff]
          %v900 = vld [vmem:[#allocation2 + $0xc0] sm:$0xff]
          %v901 = vld [vmem:[#allocation2 + $0xc8] sm:$0xff]
          %v902 = vld [vmem:[#allocation2 + $0xd0] sm:$0xff]
          %v903 = vld [vmem:[#allocation2 + $0xd8] sm:$0xff]
          %v904 = vld [vmem:[#allocation2 + $0xe0] sm:$0xff]
          %v905 = vld [vmem:[#allocation2 + $0xe8] sm:$0xff]
          %v906 = vld [vmem:[#allocation2 + $0xf0] sm:$0xff]
          %v907 = vld [vmem:[#allocation2 + $0xf8] sm:$0xff]
          %v908 = vld [vmem:[%s257] sm:$0x1]
          %v910 = vlaneseq
          %v911 = vshrl.u32 %v910, 7
          %v912 = vsub.s32 0, %v911
          %v913 = vrot.slane %v908, %v912
          %v915 = vadd.f32 %v876, %v913
          %v916 = vadd.f32 %v877, %v913
          %v917 = vadd.f32 %v878, %v913
          %v918 = vadd.f32 %v879, %v913
          %v919 = vadd.f32 %v880, %v913
          %v920 = vadd.f32 %v881, %v913
          %v921 = vadd.f32 %v882, %v913
          %v922 = vadd.f32 %v883, %v913
          %v923 = vadd.f32 %v884, %v913
          %v924 = vadd.f32 %v885, %v913
          %v925 = vadd.f32 %v886, %v913
          %v926 = vadd.f32 %v887, %v913
          %v927 = vadd.f32 %v888, %v913
          %v928 = vadd.f32 %v889, %v913
          %v929 = vadd.f32 %v890, %v913
          %v930 = vadd.f32 %v891, %v913
          %v931 = vadd.f32 %v892, %v913
          %v932 = vadd.f32 %v893, %v913
          %v933 = vadd.f32 %v894, %v913
          %v934 = vadd.f32 %v895, %v913
          %v935 = vadd.f32 %v896, %v913
          %v936 = vadd.f32 %v897, %v913
          %v937 = vadd.f32 %v898, %v913
          %v938 = vadd.f32 %v899, %v913
          %v939 = vadd.f32 %v900, %v913
          %v940 = vadd.f32 %v901, %v913
          %v941 = vadd.f32 %v902, %v913
          %v942 = vadd.f32 %v903, %v913
          %v943 = vadd.f32 %v904, %v913
          %v944 = vadd.f32 %v905, %v913
          %v945 = vadd.f32 %v906, %v913
          %v946 = vadd.f32 %v907, %v913
          %v947 = vmax.f32 %v915, 0.0
          %v948 = vmax.f32 %v916, 0.0
          %v949 = vmax.f32 %v917, 0.0
          %v950 = vmax.f32 %v918, 0.0
          %v951 = vmax.f32 %v919, 0.0
          %v952 = vmax.f32 %v920, 0.0
          %v953 = vmax.f32 %v921, 0.0
          %v954 = vmax.f32 %v922, 0.0
          %v955 = vmax.f32 %v923, 0.0
          %v956 = vmax.f32 %v924, 0.0
          %v957 = vmax.f32 %v925, 0.0
          %v958 = vmax.f32 %v926, 0.0
          %v959 = vmax.f32 %v927, 0.0
          %v960 = vmax.f32 %v928, 0.0
          %v961 = vmax.f32 %v929, 0.0
          %v962 = vmax.f32 %v930, 0.0
          %v963 = vmax.f32 %v931, 0.0
          %v964 = vmax.f32 %v932, 0.0
          %v965 = vmax.f32 %v933, 0.0
          %v966 = vmax.f32 %v934, 0.0
          %v967 = vmax.f32 %v935, 0.0
          %v968 = vmax.f32 %v936, 0.0
          %v969 = vmax.f32 %v937, 0.0
          %v970 = vmax.f32 %v938, 0.0
          %v971 = vmax.f32 %v939, 0.0
          %v972 = vmax.f32 %v940, 0.0
          %v973 = vmax.f32 %v941, 0.0
          %v974 = vmax.f32 %v942, 0.0
          %v975 = vmax.f32 %v943, 0.0
          %v976 = vmax.f32 %v944, 0.0
          %v977 = vmax.f32 %v945, 0.0
          %v978 = vmax.f32 %v946, 0.0
          %979 = vst [vmem:[%s233] sm:$0xff] %v947
          %980 = vst [vmem:[%s233 + $0x8] sm:$0xff] %v948
          %981 = vst [vmem:[%s233 + $0x10] sm:$0xff] %v949
          %982 = vst [vmem:[%s233 + $0x18] sm:$0xff] %v950
          %983 = vst [vmem:[%s233 + $0x20] sm:$0xff] %v951
          %984 = vst [vmem:[%s233 + $0x28] sm:$0xff] %v952
          %985 = vst [vmem:[%s233 + $0x30] sm:$0xff] %v953
          %986 = vst [vmem:[%s233 + $0x38] sm:$0xff] %v954
          %987 = vst [vmem:[%s233 + $0x40] sm:$0xff] %v955
          %988 = vst [vmem:[%s233 + $0x48] sm:$0xff] %v956
          %989 = vst [vmem:[%s233 + $0x50] sm:$0xff] %v957
          %990 = vst [vmem:[%s233 + $0x58] sm:$0xff] %v958
          %991 = vst [vmem:[%s233 + $0x60] sm:$0xff] %v959
          %992 = vst [vmem:[%s233 + $0x68] sm:$0xff] %v960
          %993 = vst [vmem:[%s233 + $0x70] sm:$0xff] %v961
          %994 = vst [vmem:[%s233 + $0x78] sm:$0xff] %v962
          %995 = vst [vmem:[%s233 + $0x80] sm:$0xff] %v963
          %996 = vst [vmem:[%s233 + $0x88] sm:$0xff] %v964
          %997 = vst [vmem:[%s233 + $0x90] sm:$0xff] %v965
          %998 = vst [vmem:[%s233 + $0x98] sm:$0xff] %v966
          %999 = vst [vmem:[%s233 + $0xa0] sm:$0xff] %v967
          %1000 = vst [vmem:[%s233 + $0xa8] sm:$0xff] %v968
          %1001 = vst [vmem:[%s233 + $0xb0] sm:$0xff] %v969
          %1002 = vst [vmem:[%s233 + $0xb8] sm:$0xff] %v970
          %1003 = vst [vmem:[%s233 + $0xc0] sm:$0xff] %v971
          %1004 = vst [vmem:[%s233 + $0xc8] sm:$0xff] %v972
          %1005 = vst [vmem:[%s233 + $0xd0] sm:$0xff] %v973
          %1006 = vst [vmem:[%s233 + $0xd8] sm:$0xff] %v974
          %1007 = vst [vmem:[%s233 + $0xe0] sm:$0xff] %v975
          %1008 = vst [vmem:[%s233 + $0xe8] sm:$0xff] %v976
          %1009 = vst [vmem:[%s233 + $0xf0] sm:$0xff] %v977
          %1010 = vst [vmem:[%s233 + $0xf8] sm:$0xff] %v978
        $region40: #{conv2d.1} parent=31 // pred_fallthru
          _
        %s1011 = sand.u32 %s128, 1
        %s1012 = scalar_lea.sflag [#allocation4], %s1011
        %s1013 = sand.u32 %s128, 1
        %s1014 = smul.addr %s1013, 256
        %s1015 = scalar_lea.vmem [#allocation3], %s1014
        // Predicated region
        $region41: #{conv2d.1} parent=31 // pred_check
          %p1016 = pneg %p138
        $region42: #{conv2d.1} parent=31 // pred_check_branch
          %1018 = sbr.rel (%p1016) target = $region44
        $region43: #{conv2d.1} parent=31 // pred_region
          %s1019 = smul.u32 32, %s22
          %s1021 = ssub.s32 4096, 4096
          %1022 = vsyncadd %s1012, %s1021
          %s1023 = sadd.s32 %s23, %s1019
          %s1024 = smul.addr %s1023, 128
          %s1025 = scalar_lea.hbm %s3, %s1024
          %s1026 = sshll.u32 %s1015, 4
          %s1027 = int_to_ptr.vmem [resolvable:$true] %s1026
          %1032 = dma.vmem_to_hbm [thread:$0]  %s1027, 4096, %s1025, %s1012, 128, 128, 8
        $region44: #{conv2d.1} parent=31 // pred_fallthru
          _
      $region32: #{conv2d.1} parent=5 // pred_fallthru
        _
      %p1033 = scmp.le.s32.totalorder 2, %s12
      // Predicated region
      $region45: #{conv2d.1} parent=5 // pred_check
        %p1034 = pneg %p1033
      $region46: #{conv2d.1} parent=5 // pred_check_branch
        %1036 = sbr.rel (%p1034) target = $region48
      $region47: #{conv2d.1} parent=5 // pred_region
        %s1037 = ssub.s32 %s12, 2
        // Predicated region
        $region49: #{conv2d.1} parent=47 // pred_check
          %p1038 = pneg %p144
        $region50: #{conv2d.1} parent=47 // pred_check_branch
          %1040 = sbr.rel (%p1038) target = $region52
        $region51: #{conv2d.1} parent=47 // pred_region
          %s1041 = sand.u32 %s129, 1
          %s1042 = scalar_lea.sflag [#allocation4], %s1041
          %s1043 = sand.u32 %s129, 1
          %s1044 = smul.addr %s1043, 256
          %s1045 = scalar_lea.vmem [#allocation3], %s1044
          %1046 = dma.done %s1042, 4096
        $region52: #{conv2d.1} parent=47 // pred_fallthru
          _
      $region48: #{conv2d.1} parent=5 // pred_fallthru
        _
    $region6: #{conv2d.1} parent=1 // loop_footer
      %s16 = sadd.s32 1, %s12
    $region7: #{conv2d.1} parent=1 // loop_footer_branch
      %11 = sbr.rel target = $region3
    $region8: #{conv2d.1} parent=1 // loop_exit
      _
    %1047 = vsyncpa [#allocation4], 1
    %s1048 = scalar_lea.sflag [#allocation4], 1
    %1049 = vsyncpa %s1048, 1

</llo_original>
